<compile_context>
chip_gen: v7x
topology: tpu7x:2x2x1
jax: 0.10.0
libtpu: 0.0.40
codegen_flags: <defaults>
</compile_context>

<pallas_src>
import jax
import jax.numpy as jnp
from jax.experimental import pallas as pl
from jax.experimental.pallas import tpu as pltpu


def _round_up(n, m):
    return ((n + m - 1) // m) * m


def _pad2(a, rows, cols):
    return jnp.pad(a, ((0, rows - a.shape[0]), (0, cols - a.shape[1])))


def emission_kernel(h_ref, eps_ref, w1_ref, b1_ref, wms_ref, bms_ref,
                    xrec_ref, mean_ref, std_ref):
    # Layer 1: (TB, Hp) bf16 @ (Hp, Ep) bf16 -> f32 accum, bias + ReLU in f32.
    hidden = jnp.dot(h_ref[...], w1_ref[...],
                     preferred_element_type=jnp.float32) + b1_ref[...]
    hidden = jnp.maximum(hidden, 0.0)

    # Fused mean/std head: (TB, Ep) bf16 @ (Ep, 2*Xp) bf16 -> f32 accum.
    ms = jnp.dot(hidden.astype(jnp.bfloat16), wms_ref[...],
                 preferred_element_type=jnp.float32) + bms_ref[...]

    xp = mean_ref.shape[-1]                  # static, 128-aligned split point
    mean = ms[:, :xp]
    std_pre = ms[:, xp:]
    # ELU (alpha=1) + 1 + 1e-12, all in f32
    std = jnp.where(std_pre > 0, std_pre, jnp.exp(std_pre) - 1.0) + (1.0 + 1e-12)
    xrec = mean + std * eps_ref[...]

    mean_ref[...] = mean
    std_ref[...] = std
    xrec_ref[...] = xrec


def emission_forward(h_t, params, eps, *, batch_tile=512):
    """Runs the Emission forward pass in one Pallas kernel.

    h_t:    (B, h_dim) float32
    params: dict with w1 (E,H), b1 (1,E), wm (X,E), bm (1,X), ws (X,E), bs (1,X)
            (PyTorch nn.Linear layout)
    eps:    (B, x_dim) float32 -- standard-normal noise for reparameterization
    """
    B, h_dim = h_t.shape
    e_dim = params["w1"].shape[0]
    x_dim = params["wm"].shape[0]

    # Hardware-aligned padded dims.
    Hp = _round_up(h_dim, 128)
    Ep = _round_up(e_dim, 128)
    Xp = _round_up(x_dim, 128)
    TB = _round_up(min(batch_tile, _round_up(B, 8)), 8)
    Bp = _round_up(B, TB)

    # --- parameter prep (transpose to (in,out), pad, fuse heads, cast bf16) ---
    w1t = _pad2(params["w1"].T, Hp, Ep).astype(jnp.bfloat16)           # (Hp, Ep)
    b1 = _pad2(params["b1"], 1, Ep).astype(jnp.float32)                # (1, Ep)
    wms = jnp.concatenate(
        [_pad2(params["wm"].T, Ep, Xp), _pad2(params["ws"].T, Ep, Xp)],
        axis=-1).astype(jnp.bfloat16)                                  # (Ep, 2Xp)
    bms = jnp.concatenate(
        [_pad2(params["bm"], 1, Xp), _pad2(params["bs"], 1, Xp)],
        axis=-1).astype(jnp.float32)                                   # (1, 2Xp)

    h_p = _pad2(h_t, Bp, Hp).astype(jnp.bfloat16)                      # (Bp, Hp)
    eps_p = _pad2(eps, Bp, Xp).astype(jnp.float32)                     # (Bp, Xp)

    # VMEM budget: resident weights + double-buffered per-tile activations.
    weight_bytes = (Hp * Ep + Ep * 2 * Xp) * 2 + (Ep + 2 * Xp) * 4
    step_bytes = TB * Hp * 2 + TB * Xp * 4 + 3 * TB * Xp * 4
    vmem_limit = int(min(max(4 * (weight_bytes + 2 * step_bytes), 16 * 2**20),
                         48 * 2**20))

    grid = (Bp // TB,)

    def batch_spec(cols):
        return pl.BlockSpec((TB, cols), lambda i: (i, 0))

    def resident_spec(shape):
        return pl.BlockSpec(shape, lambda i: (0, 0))

    out_shape = tuple(jax.ShapeDtypeStruct((Bp, Xp), jnp.float32)
                      for _ in range(3))

    xrec_p, mean_p, std_p = pl.pallas_call(
        emission_kernel,
        out_shape=out_shape,
        grid=grid,
        in_specs=[
            batch_spec(Hp),                 # h tile (bf16)
            batch_spec(Xp),                 # eps tile (f32)
            resident_spec((Hp, Ep)),        # W1^T (bf16), VMEM-resident
            resident_spec((1, Ep)),         # b1  (f32)
            resident_spec((Ep, 2 * Xp)),    # [Wm^T | Ws^T] (bf16)
            resident_spec((1, 2 * Xp)),     # [bm | bs] (f32)
        ],
        out_specs=tuple(batch_spec(Xp) for _ in range(3)),
        compiler_params=pltpu.CompilerParams(
            dimension_semantics=("parallel",),
            vmem_limit_bytes=vmem_limit),
    )(h_p, eps_p, w1t, b1, wms, bms)

    return (xrec_p[:B, :x_dim], mean_p[:B, :x_dim], std_p[:B, :x_dim])


def init_params(key, h_dim, emission_dim, x_dim):
    """Deterministic parameter init mimicking nn.Linear default (uniform)."""
    ks = jax.random.split(key, 6)

    def linear(kw, kb, out_f, in_f):
        bound = 1.0 / jnp.sqrt(in_f)
        w = jax.random.uniform(kw, (out_f, in_f), jnp.float32, -bound, bound)
        b = jax.random.uniform(kb, (1, out_f), jnp.float32, -bound, bound)
        return w, b

    w1, b1 = linear(ks[0], ks[1], emission_dim, h_dim)
    wm, bm = linear(ks[2], ks[3], x_dim, emission_dim)
    ws, bs = linear(ks[4], ks[5], x_dim, emission_dim)
    return dict(w1=w1, b1=b1, wm=wm, bm=bm, ws=ws, bs=bs)


def emission_reference(h_t, params, eps):
    """Pure-JAX reference emulating the kernel's bf16-operand / f32-accum matmuls."""
    bf = jnp.bfloat16
    h = h_t.astype(bf)
    hidden = jnp.dot(h, params["w1"].T.astype(bf),
                     preferred_element_type=jnp.float32) + params["b1"]
    hidden = jnp.maximum(hidden, 0.0)
    hb = hidden.astype(bf)
    mean = jnp.dot(hb, params["wm"].T.astype(bf),
                   preferred_element_type=jnp.float32) + params["bm"]
    pre = jnp.dot(hb, params["ws"].T.astype(bf),
                  preferred_element_type=jnp.float32) + params["bs"]
    std = jnp.where(pre > 0, pre, jnp.exp(pre) - 1.0) + 1.0 + 1e-12
    return mean + std * eps, mean, std


if __name__ == "__main__":
    B, h_dim, emission_dim, x_dim = 2, 32, 32, 16

    key = jax.random.PRNGKey(0)
    k_h, k_p, k_e = jax.random.split(key, 3)

    h_t = jax.random.normal(k_h, (B, h_dim), dtype=jnp.float32)
    params = init_params(k_p, h_dim, emission_dim, x_dim)
    eps = jax.random.normal(k_e, (B, x_dim), dtype=jnp.float32)

    xt_recon, proposed_mean, proposed_std = emission_forward(h_t, params, eps)
    jax.block_until_ready((xt_recon, proposed_mean, proposed_std))

    ref_x, ref_m, ref_s = emission_reference(h_t, params, eps)
    assert xt_recon.shape == (B, x_dim)
    assert jnp.allclose(proposed_mean, ref_m, atol=2e-3, rtol=2e-3)
    assert jnp.allclose(proposed_std, ref_s, atol=2e-3, rtol=2e-3)
    assert jnp.allclose(xt_recon, ref_x, atol=2e-3, rtol=2e-3)

    print("KERNEL_OK")
</pallas_src>

<mosaic_0001>
module attributes {stable_mosaic.version = 11 : i64} {
  func.func @emission_kernel(%arg0: i32, %arg1: memref<8x128xbf16, #tpu.memory_space<vmem>>, %arg2: memref<8x128xf32, #tpu.memory_space<vmem>>, %arg3: memref<128x128xbf16, #tpu.memory_space<vmem>>, %arg4: memref<1x128xf32, #tpu.memory_space<vmem>>, %arg5: memref<128x256xbf16, #tpu.memory_space<vmem>>, %arg6: memref<1x256xf32, #tpu.memory_space<vmem>>, %arg7: memref<8x128xf32, #tpu.memory_space<vmem>>, %arg8: memref<8x128xf32, #tpu.memory_space<vmem>>, %arg9: memref<8x128xf32, #tpu.memory_space<vmem>>) attributes {dimension_semantics = [#tpu.dimension_semantics<parallel>], iteration_bounds = array<i64: 1>, scalar_prefetch = 0 : i64, scratch_operands = 0 : i64, tpu.core_type = #tpu.core_type<tc>, window_params = [{transform_indices = @transform_0, window_bounds = array<i64: 8, 128>}, {transform_indices = @transform_1, window_bounds = array<i64: 8, 128>}, {pipeline_mode = #tpu.pipeline_mode<synchronous>, transform_indices = @transform_2, window_bounds = array<i64: 128, 128>}, {pipeline_mode = #tpu.pipeline_mode<synchronous>, transform_indices = @transform_3, window_bounds = array<i64: 1, 128>}, {pipeline_mode = #tpu.pipeline_mode<synchronous>, transform_indices = @transform_4, window_bounds = array<i64: 128, 256>}, {pipeline_mode = #tpu.pipeline_mode<synchronous>, transform_indices = @transform_5, window_bounds = array<i64: 1, 256>}, {transform_indices = @transform_6, window_bounds = array<i64: 8, 128>}, {transform_indices = @transform_7, window_bounds = array<i64: 8, 128>}, {transform_indices = @transform_8, window_bounds = array<i64: 8, 128>}]} {
    %c0 = arith.constant 0 : index
    %c0_0 = arith.constant 0 : index
    %0 = vector.load %arg1[%c0, %c0_0] : memref<8x128xbf16, #tpu.memory_space<vmem>>, vector<8x128xbf16>
    %c0_1 = arith.constant 0 : index
    %c0_2 = arith.constant 0 : index
    %1 = vector.load %arg3[%c0_1, %c0_2] : memref<128x128xbf16, #tpu.memory_space<vmem>>, vector<128x128xbf16>
    %cst = arith.constant dense<0.000000e+00> : vector<8x128xf32>
    %2 = tpu.matmul %0, %1, %cst {dimension_numbers = #tpu.dot_dimension_numbers<[1], [0], [0], [1], [0, 0, 1, 1], [], []>} : vector<8x128xbf16>, vector<128x128xbf16>, vector<8x128xf32> -> vector<8x128xf32>
    %c0_3 = arith.constant 0 : index
    %c0_4 = arith.constant 0 : index
    %3 = vector.load %arg4[%c0_3, %c0_4] : memref<1x128xf32, #tpu.memory_space<vmem>>, vector<1x128xf32>
    %4 = vector.broadcast %3 : vector<1x128xf32> to vector<8x128xf32>
    %5 = arith.addf %2, %4 : vector<8x128xf32>
    %cst_5 = arith.constant 0.000000e+00 : f32
    %6 = vector.broadcast %cst_5 : f32 to vector<8x128xf32>
    %7 = arith.maximumf %5, %6 : vector<8x128xf32>
    %8 = arith.truncf %7 : vector<8x128xf32> to vector<8x128xbf16>
    %c0_6 = arith.constant 0 : index
    %c0_7 = arith.constant 0 : index
    %9 = vector.load %arg5[%c0_6, %c0_7] : memref<128x256xbf16, #tpu.memory_space<vmem>>, vector<128x256xbf16>
    %cst_8 = arith.constant dense<0.000000e+00> : vector<8x256xf32>
    %10 = tpu.matmul %8, %9, %cst_8 {dimension_numbers = #tpu.dot_dimension_numbers<[1], [0], [0], [1], [0, 0, 1, 1], [], []>} : vector<8x128xbf16>, vector<128x256xbf16>, vector<8x256xf32> -> vector<8x256xf32>
    %c0_9 = arith.constant 0 : index
    %c0_10 = arith.constant 0 : index
    %11 = vector.load %arg6[%c0_9, %c0_10] : memref<1x256xf32, #tpu.memory_space<vmem>>, vector<1x256xf32>
    %12 = vector.broadcast %11 : vector<1x256xf32> to vector<8x256xf32>
    %13 = arith.addf %10, %12 : vector<8x256xf32>
    %14 = vector.extract_strided_slice %13 {offsets = [0, 0], sizes = [8, 128], strides = [1, 1]} : vector<8x256xf32> to vector<8x128xf32>
    %15 = vector.extract_strided_slice %13 {offsets = [0, 128], sizes = [8, 128], strides = [1, 1]} : vector<8x256xf32> to vector<8x128xf32>
    %cst_11 = arith.constant 0.000000e+00 : f32
    %16 = vector.broadcast %cst_11 : f32 to vector<8x128xf32>
    %17 = arith.cmpf ogt, %15, %16 : vector<8x128xf32>
    %18 = math.exp %15 : vector<8x128xf32>
    %cst_12 = arith.constant 1.000000e+00 : f32
    %19 = vector.broadcast %cst_12 : f32 to vector<8x128xf32>
    %20 = arith.subf %18, %19 : vector<8x128xf32>
    %21 = arith.select %17, %15, %20 : vector<8x128xi1>, vector<8x128xf32>
    %cst_13 = arith.constant 1.000000e+00 : f32
    %22 = vector.broadcast %cst_13 : f32 to vector<8x128xf32>
    %23 = arith.addf %21, %22 : vector<8x128xf32>
    %c0_14 = arith.constant 0 : index
    %c0_15 = arith.constant 0 : index
    %24 = vector.load %arg2[%c0_14, %c0_15] : memref<8x128xf32, #tpu.memory_space<vmem>>, vector<8x128xf32>
    %25 = arith.mulf %23, %24 : vector<8x128xf32>
    %26 = arith.addf %14, %25 : vector<8x128xf32>
    %c0_16 = arith.constant 0 : index
    %c0_17 = arith.constant 0 : index
    %27 = vector.load %arg8[%c0_16, %c0_17] : memref<8x128xf32, #tpu.memory_space<vmem>>, vector<8x128xf32>
    tpu.vector_store %arg8[%c0_16, %c0_17], %14 {strides = array<i32>} : memref<8x128xf32, #tpu.memory_space<vmem>>, vector<8x128xf32>,
    %c0_18 = arith.constant 0 : index
    %c0_19 = arith.constant 0 : index
    %28 = vector.load %arg9[%c0_18, %c0_19] : memref<8x128xf32, #tpu.memory_space<vmem>>, vector<8x128xf32>
    tpu.vector_store %arg9[%c0_18, %c0_19], %23 {strides = array<i32>} : memref<8x128xf32, #tpu.memory_space<vmem>>, vector<8x128xf32>,
    %c0_20 = arith.constant 0 : index
    %c0_21 = arith.constant 0 : index
    %29 = vector.load %arg7[%c0_20, %c0_21] : memref<8x128xf32, #tpu.memory_space<vmem>>, vector<8x128xf32>
    tpu.vector_store %arg7[%c0_20, %c0_21], %26 {strides = array<i32>} : memref<8x128xf32, #tpu.memory_space<vmem>>, vector<8x128xf32>,
    return
  }
  func.func @transform_0(%arg0: i32) -> (i32, i32) {
    %c0_i32 = arith.constant 0 : i32
    %c0_i32_0 = arith.constant 0 : i32
    return %arg0, %c0_i32 : i32, i32
  }
  func.func @transform_1(%arg0: i32) -> (i32, i32) {
    %c0_i32 = arith.constant 0 : i32
    %c0_i32_0 = arith.constant 0 : i32
    return %arg0, %c0_i32 : i32, i32
  }
  func.func @transform_2(%arg0: i32) -> (i32, i32) {
    %c0_i32 = arith.constant 0 : i32
    %c0_i32_0 = arith.constant 0 : i32
    %c0_i32_1 = arith.constant 0 : i32
    return %c0_i32, %c0_i32_0 : i32, i32
  }
  func.func @transform_3(%arg0: i32) -> (i32, i32) {
    %c0_i32 = arith.constant 0 : i32
    %c0_i32_0 = arith.constant 0 : i32
    %c0_i32_1 = arith.constant 0 : i32
    return %c0_i32, %c0_i32_0 : i32, i32
  }
  func.func @transform_4(%arg0: i32) -> (i32, i32) {
    %c0_i32 = arith.constant 0 : i32
    %c0_i32_0 = arith.constant 0 : i32
    %c0_i32_1 = arith.constant 0 : i32
    return %c0_i32, %c0_i32_0 : i32, i32
  }
  func.func @transform_5(%arg0: i32) -> (i32, i32) {
    %c0_i32 = arith.constant 0 : i32
    %c0_i32_0 = arith.constant 0 : i32
    %c0_i32_1 = arith.constant 0 : i32
    return %c0_i32, %c0_i32_0 : i32, i32
  }
  func.func @transform_6(%arg0: i32) -> (i32, i32) {
    %c0_i32 = arith.constant 0 : i32
    %c0_i32_0 = arith.constant 0 : i32
    return %arg0, %c0_i32 : i32, i32
  }
  func.func @transform_7(%arg0: i32) -> (i32, i32) {
    %c0_i32 = arith.constant 0 : i32
    %c0_i32_0 = arith.constant 0 : i32
    return %arg0, %c0_i32 : i32, i32
  }
  func.func @transform_8(%arg0: i32) -> (i32, i32) {
    %c0_i32 = arith.constant 0 : i32
    %c0_i32_0 = arith.constant 0 : i32
    return %arg0, %c0_i32 : i32, i32
  }
}

</mosaic_0001>

<llo_original>
// kernel: tpu_custom_call.1
$region0: #{tpu_custom_call.1}
  #allocation0 [shape = 'u32[]', space=smem, size = 0x4, offset = 0x4, fixed_abs, tag = 'smem constant byte address 0x4 - core index']
  #allocation1 [shape = 'u32[144,128]{1,0:T(1,128)}', space=vmem, size = 0x12000, scoped, tag = 'internal scratch']
  %s0 = inlined_call_operand.hbm [shape: bf16[8,128], index: 0, kind: input, shape index: {}]
  %s1 = inlined_call_operand.hbm [shape: f32[8,128], index: 1, kind: input, shape index: {}]
  %s2 = inlined_call_operand.hbm [shape: bf16[128,128], index: 2, kind: input, shape index: {}]
  %s3 = inlined_call_operand.vmem [shape: f32[1,128], index: 3, kind: input, shape index: {}]
  %s4 = inlined_call_operand.hbm [shape: bf16[128,256], index: 4, kind: input, shape index: {}]
  %s5 = inlined_call_operand.vmem [shape: f32[1,256], index: 5, kind: input, shape index: {}]
  %s6 = inlined_call_operand.hbm [shape: f32[8,128], index: 6, kind: output, shape index: {0}]
  %s7 = inlined_call_operand.hbm [shape: f32[8,128], index: 7, kind: output, shape index: {1}]
  %s8 = inlined_call_operand.hbm [shape: f32[8,128], index: 8, kind: output, shape index: {2}]
  %9 = xla_tuple %s6, %s7, %s8
  %s10 = sld [smem:[#allocation0]]
  $region66: #{tpu_custom_call.1} parent=0
    _
  %s12 = ssub.s32 1, %s10
  %s13 = scalar_select 0, %s12, %s10
  $region1: #{tpu_custom_call.1} parent=0
    #allocation2 [shape = 'u8[2048]{0}', space=vmem, size = 0x800, scoped, tag = 'input window, operand 0, single buffered']
    #allocation3 [shape = 's32[1]{0}', space=sflag, size = 0x4, scoped, tag = 'scoped memory for tpu_custom_call.1']
    #allocation4 [shape = 's32[1]{0}', space=sflag, size = 0x4, scoped, tag = 'scoped memory for tpu_custom_call.1']
    #allocation5 [shape = 'u8[4096]{0}', space=vmem, size = 0x1000, scoped, tag = 'input window, operand 1, single buffered']
    #allocation6 [shape = 's32[1]{0}', space=sflag, size = 0x4, scoped, tag = 'scoped memory for tpu_custom_call.1']
    #allocation7 [shape = 'u8[32768]{0}', space=vmem, size = 0x8000, scoped, tag = 'input window, operand 2, single buffered']
    #allocation8 [shape = 'u8[65536]{0}', space=vmem, size = 0x10000, scoped, tag = 'input window, operand 4, single buffered']
    #allocation9 [shape = 's32[1]{0}', space=sflag, size = 0x4, scoped, tag = 'scoped memory for tpu_custom_call.1']
    #allocation10 [shape = 'u8[4096]{0}', space=vmem, size = 0x1000, scoped, tag = 'output window, operand 0, single buffered']
    #allocation11 [shape = 'u8[4096]{0}', space=vmem, size = 0x1000, scoped, tag = 'output window, operand 1, single buffered']
    #allocation12 [shape = 's32[1]{0}', space=sflag, size = 0x4, scoped, tag = 'scoped memory for tpu_custom_call.1']
    #allocation13 [shape = 'u8[4096]{0}', space=vmem, size = 0x1000, scoped, tag = 'output window, operand 2, single buffered']
    %14 = vsyncpa [#allocation3], 0
    %15 = vsyncpa [#allocation6], 0
    %16 = vsyncpa [#allocation9], 0
    %17 = vsyncpa [#allocation4], 0
    %18 = vsyncpa [#allocation12], 0
    // Predicated region
    $region2: #{tpu_custom_call.1} parent=1 // pred_check
      _
    $region3: #{tpu_custom_call.1} parent=1 // pred_check_branch
      %20 = sbr.rel (0) target = $region5
    $region4: #{tpu_custom_call.1} parent=1 // pred_region
      %s22 = ssub.s32 64, 64
      %23 = vsyncadd [#allocation3], %s22
      %s25 = sshll.u32 [#allocation2], 4
      %s26 = int_to_ptr.vmem [resolvable:$true] %s25
      %28 = dma.hbm_to_vmem [thread:$0]  %s0, 64, %s26, [#allocation3]
    $region5: #{tpu_custom_call.1} parent=1 // pred_fallthru
      _
    // Predicated region
    $region6: #{tpu_custom_call.1} parent=1 // pred_check
      _
    $region7: #{tpu_custom_call.1} parent=1 // pred_check_branch
      %30 = sbr.rel (0) target = $region9
    $region8: #{tpu_custom_call.1} parent=1 // pred_region
      %s32 = ssub.s32 128, 128
      %33 = vsyncadd [#allocation6], %s32
      %s35 = sshll.u32 [#allocation5], 4
      %s36 = int_to_ptr.vmem [resolvable:$true] %s35
      %38 = dma.hbm_to_vmem [thread:$0]  %s1, 128, %s36, [#allocation6]
    $region9: #{tpu_custom_call.1} parent=1 // pred_fallthru
      _
    // Predicated region
    $region10: #{tpu_custom_call.1} parent=1 // pred_check
      _
    $region11: #{tpu_custom_call.1} parent=1 // pred_check_branch
      %40 = sbr.rel (0) target = $region13
    $region12: #{tpu_custom_call.1} parent=1 // pred_region
      %s42 = ssub.s32 1024, 1024
      %43 = vsyncadd [#allocation6], %s42
      %s44 = sshll.u32 [#allocation7], 4
      %s45 = int_to_ptr.vmem [resolvable:$true] %s44
      %50 = dma.hbm_to_vmem [thread:$0]  %s2, 1024, %s45, [#allocation6], 64, 64, 4
    $region13: #{tpu_custom_call.1} parent=1 // pred_fallthru
      _
    // Predicated region
    $region14: #{tpu_custom_call.1} parent=1 // pred_check
      _
    $region15: #{tpu_custom_call.1} parent=1 // pred_check_branch
      %52 = sbr.rel (0) target = $region17
    $region16: #{tpu_custom_call.1} parent=1 // pred_region
      _
    $region17: #{tpu_custom_call.1} parent=1 // pred_fallthru
      _
    // Predicated region
    $region18: #{tpu_custom_call.1} parent=1 // pred_check
      _
    $region19: #{tpu_custom_call.1} parent=1 // pred_check_branch
      %54 = sbr.rel (0) target = $region21
    $region20: #{tpu_custom_call.1} parent=1 // pred_region
      %s56 = ssub.s32 2048, 2048
      %57 = vsyncadd [#allocation9], %s56
      %s58 = sshll.u32 [#allocation8], 4
      %s59 = int_to_ptr.vmem [resolvable:$true] %s58
      %64 = dma.hbm_to_vmem [thread:$0]  %s4, 2048, %s59, [#allocation9], 128, 128, 8
    $region21: #{tpu_custom_call.1} parent=1 // pred_fallthru
      _
    // Predicated region
    $region22: #{tpu_custom_call.1} parent=1 // pred_check
      _
    $region23: #{tpu_custom_call.1} parent=1 // pred_check_branch
      %66 = sbr.rel (0) target = $region25
    $region24: #{tpu_custom_call.1} parent=1 // pred_region
      _
    $region25: #{tpu_custom_call.1} parent=1 // pred_fallthru
      _
    // Predicated region
    $region26: #{tpu_custom_call.1} parent=1 // pred_check
      _
    $region27: #{tpu_custom_call.1} parent=1 // pred_check_branch
      %68 = sbr.rel (0) target = $region29
    $region28: #{tpu_custom_call.1} parent=1 // pred_region
      %69 = dma.done [#allocation3], 64
    $region29: #{tpu_custom_call.1} parent=1 // pred_fallthru
      _
    // Predicated region
    $region30: #{tpu_custom_call.1} parent=1 // pred_check
      _
    $region31: #{tpu_custom_call.1} parent=1 // pred_check_branch
      %71 = sbr.rel (0) target = $region33
    $region32: #{tpu_custom_call.1} parent=1 // pred_region
      %72 = dma.done [#allocation6], 128
    $region33: #{tpu_custom_call.1} parent=1 // pred_fallthru
      _
    // Predicated region
    $region34: #{tpu_custom_call.1} parent=1 // pred_check
      _
    $region35: #{tpu_custom_call.1} parent=1 // pred_check_branch
      %74 = sbr.rel (0) target = $region37
    $region36: #{tpu_custom_call.1} parent=1 // pred_region
      %75 = dma.done [#allocation6], 1024
    $region37: #{tpu_custom_call.1} parent=1 // pred_fallthru
      _
    // Predicated region
    $region38: #{tpu_custom_call.1} parent=1 // pred_check
      _
    $region39: #{tpu_custom_call.1} parent=1 // pred_check_branch
      %77 = sbr.rel (0) target = $region41
    $region40: #{tpu_custom_call.1} parent=1 // pred_region
      %78 = dma.done [#allocation9], 2048
    $region41: #{tpu_custom_call.1} parent=1 // pred_fallthru
      _
    %v80 = vld [vmem:[#allocation2] sm:$0xf]
    %v81 = vld [vmem:[#allocation7] sm:$0xf]
    %v82 = vld [vmem:[#allocation7 + $0x4] sm:$0xf]
    %v83 = vld [vmem:[#allocation7 + $0x8] sm:$0xf]
    %v84 = vld [vmem:[#allocation7 + $0xc] sm:$0xf]
    %v85 = vld [vmem:[#allocation7 + $0x10] sm:$0xf]
    %v86 = vld [vmem:[#allocation7 + $0x14] sm:$0xf]
    %v87 = vld [vmem:[#allocation7 + $0x18] sm:$0xf]
    %v88 = vld [vmem:[#allocation7 + $0x1c] sm:$0xf]
    %v89 = vld [vmem:[#allocation7 + $0x20] sm:$0xf]
    %v90 = vld [vmem:[#allocation7 + $0x24] sm:$0xf]
    %v91 = vld [vmem:[#allocation7 + $0x28] sm:$0xf]
    %v92 = vld [vmem:[#allocation7 + $0x2c] sm:$0xf]
    %v93 = vld [vmem:[#allocation7 + $0x30] sm:$0xf]
    %v94 = vld [vmem:[#allocation7 + $0x34] sm:$0xf]
    %v95 = vld [vmem:[#allocation7 + $0x38] sm:$0xf]
    %v96 = vld [vmem:[#allocation7 + $0x3c] sm:$0xf]
    %v97 = vld [vmem:[%s3] sm:$0x1]
    %v99 = vlaneseq
    %v100 = vshrl.u32 %v99, 7
    %v101 = vsub.s32 0, %v100
    %v102 = vrot.slane %v97, %v101
    %v120 = vunpack.c.l.b16 %v81
    %v121 = vunpack.c.l.b16 %v82
    %v122 = vunpack.c.l.b16 %v83
    %v123 = vunpack.c.l.b16 %v84
    %v124 = vunpack.c.l.b16 %v85
    %v125 = vunpack.c.l.b16 %v86
    %v126 = vunpack.c.l.b16 %v87
    %v127 = vunpack.c.l.b16 %v88
    %v128 = vunpack.c.l.b16 %v89
    %v129 = vunpack.c.l.b16 %v90
    %v130 = vunpack.c.l.b16 %v91
    %v131 = vunpack.c.l.b16 %v92
    %v132 = vunpack.c.l.b16 %v93
    %v133 = vunpack.c.l.b16 %v94
    %v134 = vunpack.c.l.b16 %v95
    %v135 = vunpack.c.l.b16 %v96
    %v136 = vpack.c.b16 %v121, %v120
    %v137 = vpack.c.b16 %v123, %v122
    %v138 = vpack.c.b16 %v125, %v124
    %v139 = vpack.c.b16 %v127, %v126
    %v140 = vpack.c.b16 %v129, %v128
    %v141 = vpack.c.b16 %v131, %v130
    %v142 = vpack.c.b16 %v133, %v132
    %v143 = vpack.c.b16 %v135, %v134
    %152 = vmatprep.subr.bf16.mxu0 0
    %153 = vmatpush1.bf16.msra.mxu0 %v136
    %154 = vmatprep.subr.bf16.mxu0 0
    %155 = vmatpush1.bf16.msra.mxu0 %v137
    %156 = vmatprep.subr.bf16.mxu0 0
    %157 = vmatpush1.bf16.msra.mxu0 %v138
    %158 = vmatprep.subr.bf16.mxu0 0
    %159 = vmatpush1.bf16.msra.mxu0 %v139
    %160 = vmatprep.subr.bf16.mxu0 0
    %161 = vmatpush1.bf16.msra.mxu0 %v140
    %162 = vmatprep.subr.bf16.mxu0 0
    %163 = vmatpush1.bf16.msra.mxu0 %v141
    %164 = vmatprep.subr.bf16.mxu0 0
    %165 = vmatpush1.bf16.msra.mxu0 %v142
    %166 = vmatprep.subr.bf16.mxu0 0
    %167 = vmatpush1.bf16.msra.mxu0 %v143
    %168 = vmatprep.subr.bf16.mxu0 0
    %169 = vmatpush1.bf16.msra.mxu0 0
    %170 = vmatprep.subr.bf16.mxu0 0
    %171 = vmatpush1.bf16.msra.mxu0 0
    %172 = vmatprep.subr.bf16.mxu0 0
    %173 = vmatpush1.bf16.msra.mxu0 0
    %174 = vmatprep.subr.bf16.mxu0 0
    %175 = vmatpush1.bf16.msra.mxu0 0
    %176 = vmatprep.subr.bf16.mxu0 0
    %177 = vmatpush1.bf16.msra.mxu0 0
    %178 = vmatprep.subr.bf16.mxu0 0
    %179 = vmatpush1.bf16.msra.mxu0 0
    %180 = vmatprep.subr.bf16.mxu0 0
    %181 = vmatpush1.bf16.msra.mxu0 0
    %182 = vmatprep.subr.bf16.mxu0 0
    %183 = vmatpush1.bf16.msra.mxu0 0
    %184 = vmatprep.mubr.bf16.mxu0 0
    %185 = vmatmul.mubr.bf16.gmra.mrb[0].mxu0 %v80
    %v186 = vpop.f32.mrb[0].mxu0
    %v187 = vadd.f32 %v102, %v186
    %v188 = vpop.f32.mrb[0].mxu0
    %v189 = vpop.f32.mrb[0].mxu0
    %v190 = vpop.f32.mrb[0].mxu0
    %191 = vdwg.mxu0
    %v192 = vmax.f32 %v187, 0.0
    %v193 = vpack.c.bf16 %v192, %v192
    %v194 = vld [vmem:[#allocation8] sm:$0xff]
    %v195 = vld [vmem:[#allocation8 + $0x8] sm:$0xff]
    %v196 = vld [vmem:[#allocation8 + $0x10] sm:$0xff]
    %v197 = vld [vmem:[#allocation8 + $0x18] sm:$0xff]
    %v198 = vld [vmem:[#allocation8 + $0x20] sm:$0xff]
    %v199 = vld [vmem:[#allocation8 + $0x28] sm:$0xff]
    %v200 = vld [vmem:[#allocation8 + $0x30] sm:$0xff]
    %v201 = vld [vmem:[#allocation8 + $0x38] sm:$0xff]
    %v202 = vld [vmem:[#allocation8 + $0x40] sm:$0xff]
    %v203 = vld [vmem:[#allocation8 + $0x48] sm:$0xff]
    %v204 = vld [vmem:[#allocation8 + $0x50] sm:$0xff]
    %v205 = vld [vmem:[#allocation8 + $0x58] sm:$0xff]
    %v206 = vld [vmem:[#allocation8 + $0x60] sm:$0xff]
    %v207 = vld [vmem:[#allocation8 + $0x68] sm:$0xff]
    %v208 = vld [vmem:[#allocation8 + $0x70] sm:$0xff]
    %v209 = vld [vmem:[#allocation8 + $0x78] sm:$0xff]
    %v210 = vld [vmem:[%s5] sm:$0x3]
    %v212 = vlaneseq
    %v213 = vshrl.u32 %v212, 7
    %v214 = vsub.s32 0, %v213
    %v215 = vrot.slane %v210, %v214
    %v216 = vlaneseq
    %v217 = vshrl.u32 %v216, 7
    %v218 = vsub.s32 1, %v217
    %v219 = vrot.slane %v210, %v218
    %v238 = vunpack.c.l.b16 %v194
    %v239 = vunpack.c.h.b16 %v194
    %v240 = vunpack.c.l.b16 %v195
    %v241 = vunpack.c.h.b16 %v195
    %v242 = vunpack.c.l.b16 %v196
    %v243 = vunpack.c.h.b16 %v196
    %v244 = vunpack.c.l.b16 %v197
    %v245 = vunpack.c.h.b16 %v197
    %v246 = vunpack.c.l.b16 %v198
    %v247 = vunpack.c.h.b16 %v198
    %v248 = vunpack.c.l.b16 %v199
    %v249 = vunpack.c.h.b16 %v199
    %v250 = vunpack.c.l.b16 %v200
    %v251 = vunpack.c.h.b16 %v200
    %v252 = vunpack.c.l.b16 %v201
    %v253 = vunpack.c.h.b16 %v201
    %v254 = vunpack.c.l.b16 %v202
    %v255 = vunpack.c.h.b16 %v202
    %v256 = vunpack.c.l.b16 %v203
    %v257 = vunpack.c.h.b16 %v203
    %v258 = vunpack.c.l.b16 %v204
    %v259 = vunpack.c.h.b16 %v204
    %v260 = vunpack.c.l.b16 %v205
    %v261 = vunpack.c.h.b16 %v205
    %v262 = vunpack.c.l.b16 %v206
    %v263 = vunpack.c.h.b16 %v206
    %v264 = vunpack.c.l.b16 %v207
    %v265 = vunpack.c.h.b16 %v207
    %v266 = vunpack.c.l.b16 %v208
    %v267 = vunpack.c.h.b16 %v208
    %v268 = vunpack.c.l.b16 %v209
    %v269 = vunpack.c.h.b16 %v209
    %v270 = vpack.c.b16 %v240, %v238
    %v271 = vpack.c.b16 %v241, %v239
    %v272 = vpack.c.b16 %v244, %v242
    %v273 = vpack.c.b16 %v245, %v243
    %v274 = vpack.c.b16 %v248, %v246
    %v275 = vpack.c.b16 %v249, %v247
    %v276 = vpack.c.b16 %v252, %v250
    %v277 = vpack.c.b16 %v253, %v251
    %v278 = vpack.c.b16 %v256, %v254
    %v279 = vpack.c.b16 %v257, %v255
    %v280 = vpack.c.b16 %v260, %v258
    %v281 = vpack.c.b16 %v261, %v259
    %v282 = vpack.c.b16 %v264, %v262
    %v283 = vpack.c.b16 %v265, %v263
    %v284 = vpack.c.b16 %v268, %v266
    %v285 = vpack.c.b16 %v269, %v267
    %302 = vmatprep.subr.bf16.mxu0 %v271
    %303 = vmatpush1.bf16.msra.mxu0 %v270
    %304 = vmatprep.subr.bf16.mxu0 %v273
    %305 = vmatpush1.bf16.msra.mxu0 %v272
    %306 = vmatprep.subr.bf16.mxu0 %v275
    %307 = vmatpush1.bf16.msra.mxu0 %v274
    %308 = vmatprep.subr.bf16.mxu0 %v277
    %309 = vmatpush1.bf16.msra.mxu0 %v276
    %310 = vmatprep.subr.bf16.mxu0 %v279
    %311 = vmatpush1.bf16.msra.mxu0 %v278
    %312 = vmatprep.subr.bf16.mxu0 %v281
    %313 = vmatpush1.bf16.msra.mxu0 %v280
    %314 = vmatprep.subr.bf16.mxu0 %v283
    %315 = vmatpush1.bf16.msra.mxu0 %v282
    %316 = vmatprep.subr.bf16.mxu0 %v285
    %317 = vmatpush1.bf16.msra.mxu0 %v284
    %318 = vmatprep.subr.bf16.mxu0 0
    %319 = vmatpush1.bf16.msra.mxu0 0
    %320 = vmatprep.subr.bf16.mxu0 0
    %321 = vmatpush1.bf16.msra.mxu0 0
    %322 = vmatprep.subr.bf16.mxu0 0
    %323 = vmatpush1.bf16.msra.mxu0 0
    %324 = vmatprep.subr.bf16.mxu0 0
    %325 = vmatpush1.bf16.msra.mxu0 0
    %326 = vmatprep.subr.bf16.mxu0 0
    %327 = vmatpush1.bf16.msra.mxu0 0
    %328 = vmatprep.subr.bf16.mxu0 0
    %329 = vmatpush1.bf16.msra.mxu0 0
    %330 = vmatprep.subr.bf16.mxu0 0
    %331 = vmatpush1.bf16.msra.mxu0 0
    %332 = vmatprep.subr.bf16.mxu0 0
    %333 = vmatpush1.bf16.msra.mxu0 0
    %334 = vmatprep.mubr.bf16.mxu0 0
    %335 = vmatmul.mubr.bf16.gmra.mrb[0].mxu0 %v193
    %v336 = vpop.f32.mrb[0].mxu0
    %v337 = vadd.f32 %v215, %v336
    %v338 = vpop.f32.mrb[0].mxu0
    %v339 = vadd.f32 %v219, %v338
    %v340 = vpop.f32.mrb[0].mxu0
    %v341 = vpop.f32.mrb[0].mxu0
    %342 = vdwg.mxu0
    %vm343 = vcmp.gt.f32.partialorder %v339, 0.0
    %v344 = vmul.f32 %v339, 1.442695
    %v345 = vpow.pop %v344
    %v346 = vsub.f32 %v345, 1.0
    %v347 = vsel %vm343, %v339, %v346
    %v348 = vadd.f32 %v347, 1.0
    %v349 = vld [vmem:[#allocation5] sm:$0xff]
    %v350 = vmul.f32 %v348, %v349
    %v351 = vadd.f32 %v337, %v350
    %352 = vst [vmem:[#allocation11] sm:$0xff] %v337
    %353 = vst [vmem:[#allocation13] sm:$0xff] %v348
    %354 = vst [vmem:[#allocation10] sm:$0xff] %v351
    // Predicated region
    $region42: #{tpu_custom_call.1} parent=1 // pred_check
      _
    $region43: #{tpu_custom_call.1} parent=1 // pred_check_branch
      %356 = sbr.rel (0) target = $region45
    $region44: #{tpu_custom_call.1} parent=1 // pred_region
      %s358 = ssub.s32 128, 128
      %359 = vsyncadd [#allocation4], %s358
      %s361 = sshll.u32 [#allocation10], 4
      %s362 = int_to_ptr.vmem [resolvable:$true] %s361
      %364 = dma.vmem_to_hbm [thread:$0]  %s362, 128, %s6, [#allocation4]
    $region45: #{tpu_custom_call.1} parent=1 // pred_fallthru
      _
    // Predicated region
    $region46: #{tpu_custom_call.1} parent=1 // pred_check
      _
    $region47: #{tpu_custom_call.1} parent=1 // pred_check_branch
      %366 = sbr.rel (0) target = $region49
    $region48: #{tpu_custom_call.1} parent=1 // pred_region
      %s368 = ssub.s32 128, 128
      %369 = vsyncadd [#allocation12], %s368
      %s371 = sshll.u32 [#allocation11], 4
      %s372 = int_to_ptr.vmem [resolvable:$true] %s371
      %374 = dma.vmem_to_hbm [thread:$0]  %s372, 128, %s7, [#allocation12]
    $region49: #{tpu_custom_call.1} parent=1 // pred_fallthru
      _
    // Predicated region
    $region50: #{tpu_custom_call.1} parent=1 // pred_check
      _
    $region51: #{tpu_custom_call.1} parent=1 // pred_check_branch
      %376 = sbr.rel (0) target = $region53
    $region52: #{tpu_custom_call.1} parent=1 // pred_region
      %s378 = ssub.s32 128, 128
      %379 = vsyncadd [#allocation12], %s378
      %s381 = sshll.u32 [#allocation13], 4
      %s382 = int_to_ptr.vmem [resolvable:$true] %s381
      %384 = dma.vmem_to_hbm [thread:$0]  %s382, 128, %s8, [#allocation12]
    $region53: #{tpu_custom_call.1} parent=1 // pred_fallthru
      _
    // Predicated region
    $region54: #{tpu_custom_call.1} parent=1 // pred_check
      _
    $region55: #{tpu_custom_call.1} parent=1 // pred_check_branch
      %386 = sbr.rel (0) target = $region57
    $region56: #{tpu_custom_call.1} parent=1 // pred_region
      %387 = dma.done [#allocation4], 128
    $region57: #{tpu_custom_call.1} parent=1 // pred_fallthru
      _
    // Predicated region
    $region58: #{tpu_custom_call.1} parent=1 // pred_check
      _
    $region59: #{tpu_custom_call.1} parent=1 // pred_check_branch
      %389 = sbr.rel (0) target = $region61
    $region60: #{tpu_custom_call.1} parent=1 // pred_region
      %390 = dma.done [#allocation12], 128
    $region61: #{tpu_custom_call.1} parent=1 // pred_fallthru
      _
    // Predicated region
    $region62: #{tpu_custom_call.1} parent=1 // pred_check
      _
    $region63: #{tpu_custom_call.1} parent=1 // pred_check_branch
      %392 = sbr.rel (0) target = $region65
    $region64: #{tpu_custom_call.1} parent=1 // pred_region
      %393 = dma.done [#allocation12], 128
    $region65: #{tpu_custom_call.1} parent=1 // pred_fallthru
      _
    %394 = vsyncpa [#allocation3], 1
    %395 = vsyncpa [#allocation6], 1
    %396 = vsyncpa [#allocation9], 1
    %397 = vsyncpa [#allocation4], 1
    %398 = vsyncpa [#allocation12], 1

</llo_original>
